<compile_context>
chip_gen: v7x
topology: tpu7x:2x2x1
jax: 0.10.0
libtpu: 0.0.40
codegen_flags: <defaults>
</compile_context>

<pallas_src>
import functools

import jax
import jax.numpy as jnp
from jax.experimental import pallas as pl
from jax.experimental.pallas import tpu as pltpu


def _round_up(x: int, m: int) -> int:
    return ((x + m - 1) // m) * m


def _router_kernel(x_ref, w_ref, weights_ref, topw_ref, tope_ref,
                   *, top_k: int, norm_p):
    # ---- linear (no bias), emitted transposed: (E, tm) --------------------
    # Contract H of W (E, H) with H of x (tm, H): the standard NT / "q @ k.T"
    # MXU pattern.  Operands stay in their native dtype, f32 accumulation.
    logits = jax.lax.dot_general(
        w_ref[...], x_ref[...],
        dimension_numbers=(((1,), (1,)), ((), ())),
        preferred_element_type=jnp.float32)                 # (E, tm) f32

    # ---- softmax over experts (axis 0), float32 ----------------------------
    # (matches .softmax(dim=-1, dtype=torch.float32) in row-major layout)
    m = jnp.max(logits, axis=0, keepdims=True)              # (1, tm)
    e = jnp.exp(logits - m)
    probs = e / jnp.sum(e, axis=0, keepdims=True)           # exact divide

    weights_ref[...] = probs.astype(weights_ref.dtype)

    # ---- top-k over the expert (sublane) axis; k is tiny -------------------
    E = probs.shape[0]
    iota = jax.lax.broadcasted_iota(jnp.int32, probs.shape, 0)   # (E, tm)
    work = probs
    top_vals = []
    for k in range(top_k):
        mv = jnp.max(work, axis=0, keepdims=True)                # (1, tm)
        # first occurrence on ties (matches torch.topk for distinct values)
        idx = jnp.min(jnp.where(work == mv, iota, E), axis=0, keepdims=True)
        tope_ref[k:k + 1, :] = idx
        top_vals.append(mv)
        work = jnp.where(iota == idx, -jnp.inf, work)

    # ---- p-norm renormalisation of the top-k weights (fast p=1, p=2) -------
    if norm_p is None:
        scale = None
    elif norm_p == 1.0:
        scale = sum(top_vals)                       # probs >= 0 -> plain sum
    elif norm_p == 2.0:
        scale = jnp.sqrt(sum(v * v for v in top_vals))
    else:
        scale = sum(jnp.abs(v) ** norm_p for v in top_vals) ** (1.0 / norm_p)

    for k in range(top_k):
        v = top_vals[k] if scale is None else top_vals[k] / scale
        topw_ref[k:k + 1, :] = v.astype(topw_ref.dtype)


def dbrx_router(hidden_states, router_weight, *, moe_top_k,
                moe_normalize_expert_weights, tm_max=1024):
    """hidden_states: (B, S, H); router_weight: (E, H) (nn.Linear.weight layout).

    Returns (weights (T,E), top_weights (T,K), top_experts (T,K) int32), T=B*S.
    """
    B, S, H = hidden_states.shape
    E = router_weight.shape[0]
    K = moe_top_k
    T = B * S
    dtype = hidden_states.dtype
    itemsize = jnp.dtype(dtype).itemsize

    x = hidden_states.reshape(T, H)                   # no pad, no extra slab
    w = (router_weight if router_weight.dtype == dtype
         else router_weight.astype(dtype))            # native (E, H) layout

    # --- token tile: large enough to amortize ~0.35us/step overhead, small
    # enough that the double-buffered x tiles stay within ~24 MiB (safe on
    # v7x's 64 MiB VMEM; automatically halves rows for f32 activations). ----
    x_budget = 24 << 20
    tm_cap = max(128, (x_budget // (2 * H * itemsize)) // 128 * 128)
    tm_max = min(tm_max, tm_cap)
    if T <= tm_max:
        tm = T                                       # single (ragged) block
    else:
        # Balance steps (keeps both v7x TensorCores busy on the parallel grid
        # axis) and keep the lane dim of the transposed outputs a mult of 128.
        n_steps = pl.cdiv(T, tm_max)
        tm = _round_up(pl.cdiv(T, n_steps), 128)
    grid = pl.cdiv(T, tm)

    kernel = functools.partial(
        _router_kernel, top_k=K, norm_p=moe_normalize_expert_weights)

    # Outputs are lane-dense (transposed) inside the kernel; flipped back below.
    out_shapes = (
        jax.ShapeDtypeStruct((E, T), dtype),          # weights^T
        jax.ShapeDtypeStruct((K, T), dtype),          # top_weights^T
        jax.ShapeDtypeStruct((K, T), jnp.int32),      # top_experts^T
        # TODO(synk): PyTorch returns int64 (LongTensor); int32 used here.
    )

    grid_spec = pltpu.PrefetchScalarGridSpec(
        num_scalar_prefetch=0,
        grid=(grid,),
        in_specs=[
            pl.BlockSpec((tm, H), lambda i: (i, 0)),
            pl.BlockSpec((E, H), lambda i: (0, 0)),
        ],
        out_specs=[
            pl.BlockSpec((E, tm), lambda i: (0, i)),
            pl.BlockSpec((K, tm), lambda i: (0, i)),
            pl.BlockSpec((K, tm), lambda i: (0, i)),
        ],
    )

    # VMEM limit computed from the actual buffers (+ headroom), not hardcoded.
    io_bytes = 2 * (tm * H * itemsize + E * H * itemsize
                    + E * tm * itemsize + K * tm * (itemsize + 4))
    scratch_bytes = 6 * E * tm * 4        # f32 logits/probs/iota/temporaries
    vmem_limit = max(32 << 20, int(io_bytes + scratch_bytes) + (8 << 20))

    cost = pl.CostEstimate(
        flops=2 * T * H * E,
        transcendentals=T * E,            # softmax exp
        bytes_accessed=(T * H * itemsize + E * H * itemsize
                        + T * E * itemsize + T * K * (itemsize + 4)),
    )

    weights_t, topw_t, tope_t = pl.pallas_call(
        kernel,
        out_shape=out_shapes,
        grid_spec=grid_spec,
        compiler_params=pltpu.CompilerParams(
            dimension_semantics=("parallel",),
            vmem_limit_bytes=vmem_limit),
        cost_estimate=cost,
    )(x, w)

    # Tiny (T*E / T*K) transposes back to the module's row-major layout.
    return weights_t.T, topw_t.T, tope_t.T


# ---------------------------------------------------------------------------
# Reference + checks
# ---------------------------------------------------------------------------
def _reference(hidden_states, router_weight, K, norm_p):
    H = hidden_states.shape[-1]
    x2 = hidden_states.reshape(-1, H).astype(jnp.float32)
    logits = x2 @ router_weight.astype(jnp.float32).T
    probs = jax.nn.softmax(logits, axis=-1)
    tv, ti = jax.lax.top_k(probs, K)
    if norm_p is None:
        tw = tv
    else:
        scale = jnp.sum(jnp.abs(tv) ** norm_p, axis=-1,
                        keepdims=True) ** (1.0 / norm_p)
        tw = tv / scale
    return probs, tv, tw, ti


def _run_and_check(hidden_states, router_weight, K, norm_p, tm_max, tag):
    weights, top_weights, top_experts = dbrx_router(
        hidden_states, router_weight, moe_top_k=K,
        moe_normalize_expert_weights=norm_p, tm_max=tm_max)
    jax.block_until_ready((weights, top_weights, top_experts))

    B, S, H = hidden_states.shape
    E = router_weight.shape[0]
    T = B * S
    probs_ref, tv_ref, tw_ref, _ = _reference(hidden_states, router_weight,
                                              K, norm_p)
    tol = 2e-3 if hidden_states.dtype == jnp.float32 else 1.6e-2  # bf16 ULPs

    assert weights.shape == (T, E) and weights.dtype == hidden_states.dtype, tag
    assert top_weights.shape == (T, K) and top_weights.dtype == hidden_states.dtype, tag
    assert top_experts.shape == (T, K) and top_experts.dtype == jnp.int32, tag
    assert jnp.allclose(weights, probs_ref.astype(weights.dtype),
                        atol=tol, rtol=tol), tag
    assert jnp.allclose(top_weights, tw_ref.astype(top_weights.dtype),
                        atol=tol, rtol=tol), tag
    # Indices must point at the top-valued experts; the gather-based check is
    # robust to near-tie ordering differences between MXU and XLA matmuls.
    gathered = jnp.take_along_axis(probs_ref, top_experts, axis=-1)
    assert jnp.allclose(gathered, tv_ref, atol=tol, rtol=tol), tag
    assert bool(jnp.all((top_experts >= 0) & (top_experts < E))), tag


if __name__ == "__main__":
    key = jax.random.PRNGKey(0)
    k1, k2, k3, k4 = jax.random.split(key, 4)

    # DBRX-like config at small scale: 16 experts, top-4, p=1 renormalisation.
    # moe_jitter_eps only applies in training mode -> not part of eval forward.
    B, S, H, E, K, NORM_P = 2, 8, 64, 16, 4, 1.0
    bound = 1.0 / (H ** 0.5)
    hidden_states = jax.random.normal(k1, (B, S, H), dtype=jnp.float32)
    router_weight = jax.random.uniform(k2, (E, H), dtype=jnp.float32,
                                       minval=-bound, maxval=bound)
    _run_and_check(hidden_states, router_weight, K, NORM_P, 1024, "single-block")

    # Multi-block path with a ragged (partial) edge tile: T=300, tm=128,
    # bf16 activations, p=2 renormalisation.
    B2, S2, H2 = 3, 100, 128
    bound2 = 1.0 / (H2 ** 0.5)
    hidden2 = jax.random.normal(k3, (B2, S2, H2), dtype=jnp.bfloat16)
    weight2 = jax.random.uniform(k4, (E, H2), dtype=jnp.float32,
                                 minval=-bound2, maxval=bound2).astype(jnp.bfloat16)
    _run_and_check(hidden2, weight2, K, 2.0, 128, "multi-block")

    print("KERNEL_OK")
</pallas_src>

<mosaic_0001>
module attributes {stable_mosaic.version = 11 : i64} {
  func.func @_router_kernel(%arg0: i32, %arg1: memref<16x64xf32, #tpu.memory_space<vmem>>, %arg2: memref<16x64xf32, #tpu.memory_space<vmem>>, %arg3: memref<16x16xf32, #tpu.memory_space<vmem>>, %arg4: memref<4x16xf32, #tpu.memory_space<vmem>>, %arg5: memref<4x16xi32, #tpu.memory_space<vmem>>) attributes {dimension_semantics = [#tpu.dimension_semantics<parallel>], iteration_bounds = array<i64: 1>, scalar_prefetch = 0 : i64, scratch_operands = 0 : i64, tpu.core_type = #tpu.core_type<tc>, window_params = [{transform_indices = @transform_0, window_bounds = array<i64: 16, 64>}, {pipeline_mode = #tpu.pipeline_mode<synchronous>, transform_indices = @transform_1, window_bounds = array<i64: 16, 64>}, {transform_indices = @transform_2, window_bounds = array<i64: 16, 16>}, {transform_indices = @transform_3, window_bounds = array<i64: 4, 16>}, {transform_indices = @transform_4, window_bounds = array<i64: 4, 16>}]} {
    %c0 = arith.constant 0 : index
    %c0_0 = arith.constant 0 : index
    %0 = vector.load %arg2[%c0, %c0_0] : memref<16x64xf32, #tpu.memory_space<vmem>>, vector<16x64xf32>
    %c0_1 = arith.constant 0 : index
    %c0_2 = arith.constant 0 : index
    %1 = vector.load %arg1[%c0_1, %c0_2] : memref<16x64xf32, #tpu.memory_space<vmem>>, vector<16x64xf32>
    %cst = arith.constant dense<0.000000e+00> : vector<16x16xf32>
    %2 = tpu.matmul %0, %1, %cst {dimension_numbers = #tpu.dot_dimension_numbers<[1], [1], [0], [0], [0, 0, 1, 0], [], []>} : vector<16x64xf32>, vector<16x64xf32>, vector<16x16xf32> -> vector<16x16xf32>
    %cst_3 = arith.constant dense<0xFF800000> : vector<16xf32>
    %3 = vector.multi_reduction <maximumf>, %2, %cst_3 [0] : vector<16x16xf32> to vector<16xf32>
    %4 = vector.shape_cast %3 : vector<16xf32> to vector<1x16xf32>
    %5 = vector.broadcast %4 : vector<1x16xf32> to vector<16x16xf32>
    %6 = arith.subf %2, %5 : vector<16x16xf32>
    %7 = math.exp %6 : vector<16x16xf32>
    %cst_4 = arith.constant dense<0.000000e+00> : vector<16xf32>
    %8 = vector.multi_reduction <add>, %7, %cst_4 [0] : vector<16x16xf32> to vector<16xf32>
    %9 = vector.shape_cast %8 : vector<16xf32> to vector<1x16xf32>
    %10 = vector.broadcast %9 : vector<1x16xf32> to vector<16x16xf32>
    %11 = arith.divf %7, %10 : vector<16x16xf32>
    %c0_5 = arith.constant 0 : index
    %c0_6 = arith.constant 0 : index
    %12 = vector.load %arg3[%c0_5, %c0_6] : memref<16x16xf32, #tpu.memory_space<vmem>>, vector<16x16xf32>
    tpu.vector_store %arg3[%c0_5, %c0_6], %11 {strides = array<i32>} : memref<16x16xf32, #tpu.memory_space<vmem>>, vector<16x16xf32>,
    %13 = tpu.iota {dimensions = array<i32: 0>} : vector<16x16xi32>
    %cst_7 = arith.constant dense<0xFF800000> : vector<16xf32>
    %14 = vector.multi_reduction <maximumf>, %11, %cst_7 [0] : vector<16x16xf32> to vector<16xf32>
    %15 = vector.shape_cast %14 : vector<16xf32> to vector<1x16xf32>
    %16 = vector.broadcast %15 : vector<1x16xf32> to vector<16x16xf32>
    %17 = arith.cmpf oeq, %11, %16 : vector<16x16xf32>
    %c16_i32 = arith.constant 16 : i32
    %18 = vector.broadcast %c16_i32 : i32 to vector<16x16xi32>
    %19 = arith.select %17, %13, %18 : vector<16x16xi1>, vector<16x16xi32>
    %cst_8 = arith.constant dense<2147483647> : vector<16xi32>
    %20 = vector.multi_reduction <minsi>, %19, %cst_8 [0] : vector<16x16xi32> to vector<16xi32>
    %21 = vector.shape_cast %20 : vector<16xi32> to vector<1x16xi32>
    %c0_9 = arith.constant 0 : index
    %c0_10 = arith.constant 0 : index
    %22 = vector.load %arg5[%c0_9, %c0_10] : memref<4x16xi32, #tpu.memory_space<vmem>>, vector<1x16xi32>
    tpu.vector_store %arg5[%c0_9, %c0_10], %21 {strides = array<i32>} : memref<4x16xi32, #tpu.memory_space<vmem>>, vector<1x16xi32>,
    %23 = vector.broadcast %21 : vector<1x16xi32> to vector<16x16xi32>
    %24 = arith.cmpi eq, %13, %23 : vector<16x16xi32>
    %cst_11 = arith.constant 0xFF800000 : f32
    %25 = vector.broadcast %cst_11 : f32 to vector<16x16xf32>
    %26 = arith.select %24, %25, %11 : vector<16x16xi1>, vector<16x16xf32>
    %cst_12 = arith.constant dense<0xFF800000> : vector<16xf32>
    %27 = vector.multi_reduction <maximumf>, %26, %cst_12 [0] : vector<16x16xf32> to vector<16xf32>
    %28 = vector.shape_cast %27 : vector<16xf32> to vector<1x16xf32>
    %29 = vector.broadcast %28 : vector<1x16xf32> to vector<16x16xf32>
    %30 = arith.cmpf oeq, %26, %29 : vector<16x16xf32>
    %c16_i32_13 = arith.constant 16 : i32
    %31 = vector.broadcast %c16_i32_13 : i32 to vector<16x16xi32>
    %32 = arith.select %30, %13, %31 : vector<16x16xi1>, vector<16x16xi32>
    %cst_14 = arith.constant dense<2147483647> : vector<16xi32>
    %33 = vector.multi_reduction <minsi>, %32, %cst_14 [0] : vector<16x16xi32> to vector<16xi32>
    %34 = vector.shape_cast %33 : vector<16xi32> to vector<1x16xi32>
    %c1 = arith.constant 1 : index
    %c0_15 = arith.constant 0 : index
    %35 = vector.load %arg5[%c1, %c0_15] : memref<4x16xi32, #tpu.memory_space<vmem>>, vector<1x16xi32>
    tpu.vector_store %arg5[%c1, %c0_15], %34 {strides = array<i32>} : memref<4x16xi32, #tpu.memory_space<vmem>>, vector<1x16xi32>,
    %36 = vector.broadcast %34 : vector<1x16xi32> to vector<16x16xi32>
    %37 = arith.cmpi eq, %13, %36 : vector<16x16xi32>
    %cst_16 = arith.constant 0xFF800000 : f32
    %38 = vector.broadcast %cst_16 : f32 to vector<16x16xf32>
    %39 = arith.select %37, %38, %26 : vector<16x16xi1>, vector<16x16xf32>
    %cst_17 = arith.constant dense<0xFF800000> : vector<16xf32>
    %40 = vector.multi_reduction <maximumf>, %39, %cst_17 [0] : vector<16x16xf32> to vector<16xf32>
    %41 = vector.shape_cast %40 : vector<16xf32> to vector<1x16xf32>
    %42 = vector.broadcast %41 : vector<1x16xf32> to vector<16x16xf32>
    %43 = arith.cmpf oeq, %39, %42 : vector<16x16xf32>
    %c16_i32_18 = arith.constant 16 : i32
    %44 = vector.broadcast %c16_i32_18 : i32 to vector<16x16xi32>
    %45 = arith.select %43, %13, %44 : vector<16x16xi1>, vector<16x16xi32>
    %cst_19 = arith.constant dense<2147483647> : vector<16xi32>
    %46 = vector.multi_reduction <minsi>, %45, %cst_19 [0] : vector<16x16xi32> to vector<16xi32>
    %47 = vector.shape_cast %46 : vector<16xi32> to vector<1x16xi32>
    %c2 = arith.constant 2 : index
    %c0_20 = arith.constant 0 : index
    %48 = vector.load %arg5[%c2, %c0_20] : memref<4x16xi32, #tpu.memory_space<vmem>>, vector<1x16xi32>
    tpu.vector_store %arg5[%c2, %c0_20], %47 {strides = array<i32>} : memref<4x16xi32, #tpu.memory_space<vmem>>, vector<1x16xi32>,
    %49 = vector.broadcast %47 : vector<1x16xi32> to vector<16x16xi32>
    %50 = arith.cmpi eq, %13, %49 : vector<16x16xi32>
    %cst_21 = arith.constant 0xFF800000 : f32
    %51 = vector.broadcast %cst_21 : f32 to vector<16x16xf32>
    %52 = arith.select %50, %51, %39 : vector<16x16xi1>, vector<16x16xf32>
    %cst_22 = arith.constant dense<0xFF800000> : vector<16xf32>
    %53 = vector.multi_reduction <maximumf>, %52, %cst_22 [0] : vector<16x16xf32> to vector<16xf32>
    %54 = vector.shape_cast %53 : vector<16xf32> to vector<1x16xf32>
    %55 = vector.broadcast %54 : vector<1x16xf32> to vector<16x16xf32>
    %56 = arith.cmpf oeq, %52, %55 : vector<16x16xf32>
    %c16_i32_23 = arith.constant 16 : i32
    %57 = vector.broadcast %c16_i32_23 : i32 to vector<16x16xi32>
    %58 = arith.select %56, %13, %57 : vector<16x16xi1>, vector<16x16xi32>
    %cst_24 = arith.constant dense<2147483647> : vector<16xi32>
    %59 = vector.multi_reduction <minsi>, %58, %cst_24 [0] : vector<16x16xi32> to vector<16xi32>
    %60 = vector.shape_cast %59 : vector<16xi32> to vector<1x16xi32>
    %c3 = arith.constant 3 : index
    %c0_25 = arith.constant 0 : index
    %61 = vector.load %arg5[%c3, %c0_25] : memref<4x16xi32, #tpu.memory_space<vmem>>, vector<1x16xi32>
    tpu.vector_store %arg5[%c3, %c0_25], %60 {strides = array<i32>} : memref<4x16xi32, #tpu.memory_space<vmem>>, vector<1x16xi32>,
    %cst_26 = arith.constant 0.000000e+00 : f32
    %62 = vector.broadcast %cst_26 : f32 to vector<1x16xf32>
    %63 = arith.addf %62, %15 : vector<1x16xf32>
    %64 = arith.addf %63, %28 : vector<1x16xf32>
    %65 = arith.addf %64, %41 : vector<1x16xf32>
    %66 = arith.addf %65, %54 : vector<1x16xf32>
    %67 = arith.divf %15, %66 : vector<1x16xf32>
    %c0_27 = arith.constant 0 : index
    %c0_28 = arith.constant 0 : index
    %68 = vector.load %arg4[%c0_27, %c0_28] : memref<4x16xf32, #tpu.memory_space<vmem>>, vector<1x16xf32>
    tpu.vector_store %arg4[%c0_27, %c0_28], %67 {strides = array<i32>} : memref<4x16xf32, #tpu.memory_space<vmem>>, vector<1x16xf32>,
    %69 = arith.divf %28, %66 : vector<1x16xf32>
    %c1_29 = arith.constant 1 : index
    %c0_30 = arith.constant 0 : index
    %70 = vector.load %arg4[%c1_29, %c0_30] : memref<4x16xf32, #tpu.memory_space<vmem>>, vector<1x16xf32>
    tpu.vector_store %arg4[%c1_29, %c0_30], %69 {strides = array<i32>} : memref<4x16xf32, #tpu.memory_space<vmem>>, vector<1x16xf32>,
    %71 = arith.divf %41, %66 : vector<1x16xf32>
    %c2_31 = arith.constant 2 : index
    %c0_32 = arith.constant 0 : index
    %72 = vector.load %arg4[%c2_31, %c0_32] : memref<4x16xf32, #tpu.memory_space<vmem>>, vector<1x16xf32>
    tpu.vector_store %arg4[%c2_31, %c0_32], %71 {strides = array<i32>} : memref<4x16xf32, #tpu.memory_space<vmem>>, vector<1x16xf32>,
    %73 = arith.divf %54, %66 : vector<1x16xf32>
    %c3_33 = arith.constant 3 : index
    %c0_34 = arith.constant 0 : index
    %74 = vector.load %arg4[%c3_33, %c0_34] : memref<4x16xf32, #tpu.memory_space<vmem>>, vector<1x16xf32>
    tpu.vector_store %arg4[%c3_33, %c0_34], %73 {strides = array<i32>} : memref<4x16xf32, #tpu.memory_space<vmem>>, vector<1x16xf32>,
    return
  }
  func.func @transform_0(%arg0: i32) -> (i32, i32) {
    %c0_i32 = arith.constant 0 : i32
    %c0_i32_0 = arith.constant 0 : i32
    return %arg0, %c0_i32 : i32, i32
  }
  func.func @transform_1(%arg0: i32) -> (i32, i32) {
    %c0_i32 = arith.constant 0 : i32
    %c0_i32_0 = arith.constant 0 : i32
    %c0_i32_1 = arith.constant 0 : i32
    return %c0_i32, %c0_i32_0 : i32, i32
  }
  func.func @transform_2(%arg0: i32) -> (i32, i32) {
    %c0_i32 = arith.constant 0 : i32
    %c0_i32_0 = arith.constant 0 : i32
    return %c0_i32, %arg0 : i32, i32
  }
  func.func @transform_3(%arg0: i32) -> (i32, i32) {
    %c0_i32 = arith.constant 0 : i32
    %c0_i32_0 = arith.constant 0 : i32
    return %c0_i32, %arg0 : i32, i32
  }
  func.func @transform_4(%arg0: i32) -> (i32, i32) {
    %c0_i32 = arith.constant 0 : i32
    %c0_i32_0 = arith.constant 0 : i32
    return %c0_i32, %arg0 : i32, i32
  }
}

</mosaic_0001>

<llo_original>
// kernel: tpu_custom_call.1
$region0: #{tpu_custom_call.1}
  #allocation0 [shape = 'u32[]', space=smem, size = 0x4, offset = 0x4, fixed_abs, tag = 'smem constant byte address 0x4 - core index']
  #allocation1 [shape = 'u32[144,128]{1,0:T(1,128)}', space=vmem, size = 0x12000, scoped, tag = 'internal scratch']
  %s0 = inlined_call_operand.hbm [shape: f32[16,64], index: 0, kind: input, shape index: {}]
  %s1 = inlined_call_operand.hbm [shape: f32[16,64], index: 1, kind: input, shape index: {}]
  %s2 = inlined_call_operand.hbm [shape: f32[16,16], index: 2, kind: output, shape index: {0}]
  %s3 = inlined_call_operand.hbm [shape: f32[4,16], index: 3, kind: output, shape index: {1}]
  %s4 = inlined_call_operand.hbm [shape: s32[4,16], index: 4, kind: output, shape index: {2}]
  %5 = xla_tuple %s2, %s3, %s4
  %s6 = sld [smem:[#allocation0]]
  $region42: #{tpu_custom_call.1} parent=0
    _
  %s8 = ssub.s32 1, %s6
  %s9 = scalar_select 0, %s8, %s6
  $region1: #{tpu_custom_call.1} parent=0
    #allocation2 [shape = 'u8[8192]{0}', space=vmem, size = 0x2000, scoped, tag = 'input window, operand 0, single buffered']
    #allocation3 [shape = 's32[1]{0}', space=sflag, size = 0x4, scoped, tag = 'scoped memory for tpu_custom_call.1']
    #allocation4 [shape = 's32[1]{0}', space=sflag, size = 0x4, scoped, tag = 'scoped memory for tpu_custom_call.1']
    #allocation5 [shape = 'u8[8192]{0}', space=vmem, size = 0x2000, scoped, tag = 'input window, operand 1, single buffered']
    #allocation6 [shape = 's32[1]{0}', space=sflag, size = 0x4, scoped, tag = 'scoped memory for tpu_custom_call.1']
    #allocation7 [shape = 'u8[8192]{0}', space=vmem, size = 0x2000, scoped, tag = 'output window, operand 0, single buffered']
    #allocation8 [shape = 'u8[2048]{0}', space=vmem, size = 0x800, scoped, tag = 'output window, operand 1, single buffered']
    #allocation9 [shape = 's32[1]{0}', space=sflag, size = 0x4, scoped, tag = 'scoped memory for tpu_custom_call.1']
    #allocation10 [shape = 'u8[2048]{0}', space=vmem, size = 0x800, scoped, tag = 'output window, operand 2, single buffered']
    %10 = vsyncpa [#allocation3], 0
    %11 = vsyncpa [#allocation6], 0
    %12 = vsyncpa [#allocation4], 0
    %13 = vsyncpa [#allocation9], 0
    // Predicated region
    $region2: #{tpu_custom_call.1} parent=1 // pred_check
      _
    $region3: #{tpu_custom_call.1} parent=1 // pred_check_branch
      %15 = sbr.rel (0) target = $region5
    $region4: #{tpu_custom_call.1} parent=1 // pred_region
      %s17 = ssub.s32 256, 256
      %18 = vsyncadd [#allocation3], %s17
      %s19 = sshll.u32 [#allocation2], 4
      %s20 = int_to_ptr.vmem [resolvable:$true] %s19
      %25 = dma.hbm_to_vmem [thread:$0]  %s0, 256, %s20, [#allocation3], 128, 128, 8
    $region5: #{tpu_custom_call.1} parent=1 // pred_fallthru
      _
    // Predicated region
    $region6: #{tpu_custom_call.1} parent=1 // pred_check
      _
    $region7: #{tpu_custom_call.1} parent=1 // pred_check_branch
      %27 = sbr.rel (0) target = $region9
    $region8: #{tpu_custom_call.1} parent=1 // pred_region
      %s29 = ssub.s32 256, 256
      %30 = vsyncadd [#allocation6], %s29
      %s31 = sshll.u32 [#allocation5], 4
      %s32 = int_to_ptr.vmem [resolvable:$true] %s31
      %37 = dma.hbm_to_vmem [thread:$0]  %s1, 256, %s32, [#allocation6], 128, 128, 8
    $region9: #{tpu_custom_call.1} parent=1 // pred_fallthru
      _
    // Predicated region
    $region10: #{tpu_custom_call.1} parent=1 // pred_check
      _
    $region11: #{tpu_custom_call.1} parent=1 // pred_check_branch
      %39 = sbr.rel (0) target = $region13
    $region12: #{tpu_custom_call.1} parent=1 // pred_region
      %40 = dma.done [#allocation3], 256
    $region13: #{tpu_custom_call.1} parent=1 // pred_fallthru
      _
    // Predicated region
    $region14: #{tpu_custom_call.1} parent=1 // pred_check
      _
    $region15: #{tpu_custom_call.1} parent=1 // pred_check_branch
      %42 = sbr.rel (0) target = $region17
    $region16: #{tpu_custom_call.1} parent=1 // pred_region
      %43 = dma.done [#allocation6], 256
    $region17: #{tpu_custom_call.1} parent=1 // pred_fallthru
      _
    %v44 = vld [vmem:[#allocation5] sm:$0xff]
    %v45 = vld [vmem:[#allocation5 + $0x8] sm:$0xff]
    %v46 = vld [vmem:[#allocation2] sm:$0xff]
    %v47 = vld [vmem:[#allocation2 + $0x8] sm:$0xff]
    %vm48 = vcmask 523264
    %v50 = vsel %vm48, %v44, 0
    %v53 = vsel %vm48, %v45, 0
    %v56 = vsel %vm48, %v46, 0
    %v59 = vsel %vm48, %v47, 0
    %61 = vmatprep.subr.mxu0 0.0
    %62 = vmatpush1.xpose.msra.mxu0 %v56
    %63 = vmatprep.subr.mxu0 0.0
    %64 = vmatpush1.xpose.msra.mxu0 %v59
    %65 = vmatprep.subr.mxu0 0.0
    %66 = vmatpush1.xpose.msra.mxu0 0.0
    %67 = vmatprep.subr.mxu0 0.0
    %68 = vmatpush1.xpose.msra.mxu0 0.0
    %69 = vmatprep.subr.mxu0 0.0
    %70 = vmatpush1.xpose.msra.mxu0 0.0
    %71 = vmatprep.subr.mxu0 0.0
    %72 = vmatpush1.xpose.msra.mxu0 0.0
    %73 = vmatprep.subr.mxu0 0.0
    %74 = vmatpush1.xpose.msra.mxu0 0.0
    %75 = vmatprep.subr.mxu0 0.0
    %76 = vmatpush1.xpose.msra.mxu0 0.0
    %77 = vmatprep.subr.mxu0 0.0
    %78 = vmatpush1.xpose.msra.mxu0 0.0
    %79 = vmatprep.subr.mxu0 0.0
    %80 = vmatpush1.xpose.msra.mxu0 0.0
    %81 = vmatprep.subr.mxu0 0.0
    %82 = vmatpush1.xpose.msra.mxu0 0.0
    %83 = vmatprep.subr.mxu0 0.0
    %84 = vmatpush1.xpose.msra.mxu0 0.0
    %85 = vmatprep.subr.mxu0 0.0
    %86 = vmatpush1.xpose.msra.mxu0 0.0
    %87 = vmatprep.subr.mxu0 0.0
    %88 = vmatpush1.xpose.msra.mxu0 0.0
    %89 = vmatprep.subr.mxu0 0.0
    %90 = vmatpush1.xpose.msra.mxu0 0.0
    %91 = vmatprep.subr.mxu0 0.0
    %92 = vmatpush1.xpose.msra.mxu0 0.0
    %93 = vmatprep.subr.mxu0 0.0
    %94 = vmatpush1.xpose.msra.mxu0 0.0
    %95 = vmatprep.subr.mxu0 0.0
    %96 = vmatpush1.xpose.msra.mxu0 0.0
    %97 = vmatprep.subr.mxu0 0.0
    %98 = vmatpush1.xpose.msra.mxu0 0.0
    %99 = vmatprep.subr.mxu0 0.0
    %100 = vmatpush1.xpose.msra.mxu0 0.0
    %101 = vmatprep.subr.mxu0 0.0
    %102 = vmatpush1.xpose.msra.mxu0 0.0
    %103 = vmatprep.subr.mxu0 0.0
    %104 = vmatpush1.xpose.msra.mxu0 0.0
    %105 = vmatprep.subr.mxu0 0.0
    %106 = vmatpush1.xpose.msra.mxu0 0.0
    %107 = vmatprep.subr.mxu0 0.0
    %108 = vmatpush1.xpose.msra.mxu0 0.0
    %109 = vmatprep.subr.mxu0 0.0
    %110 = vmatpush1.xpose.msra.mxu0 0.0
    %111 = vmatprep.subr.mxu0 0.0
    %112 = vmatpush1.xpose.msra.mxu0 0.0
    %113 = vmatprep.subr.mxu0 0.0
    %114 = vmatpush1.xpose.msra.mxu0 0.0
    %115 = vmatprep.subr.mxu0 0.0
    %116 = vmatpush1.xpose.msra.mxu0 0.0
    %117 = vmatprep.subr.mxu0 0.0
    %118 = vmatpush1.xpose.msra.mxu0 0.0
    %119 = vmatprep.subr.mxu0 0.0
    %120 = vmatpush1.xpose.msra.mxu0 0.0
    %121 = vmatprep.subr.mxu0 0.0
    %122 = vmatpush1.xpose.msra.mxu0 0.0
    %123 = vmatprep.subr.mxu0 0.0
    %124 = vmatpush1.xpose.msra.mxu0 0.0
    %125 = vmatprep.mubr.f32.mxu0 0.0
    %126 = vmatmul.mubr.f32.gmra.mrb[0].mxu0 %v50
    %v127 = vpop.f32.mrb[0].mxu0
    %v128 = vadd.f32 0.0, %v127
    %v129 = vpop.f32.mrb[0].mxu0
    %130 = vmatprep.mubr.f32.mxu0 0.0
    %131 = vmatmul.mubr.f32.gmra.mrb[0].mxu0 %v53
    %v132 = vpop.f32.mrb[0].mxu0
    %v133 = vadd.f32 0.0, %v132
    %v134 = vpop.f32.mrb[0].mxu0
    %135 = vdwg.mxu0
    %vm136 = vcmask 130048
    %v137 = vsel %vm136, %v128, -inf
    %v138 = vsel %vm136, %v133, -inf
    %v139 = vmax.f32 %v137, %v138
    %v140 = vrot.slane %v139, 4
    %v141 = vmax.f32 %v139, %v140
    %v142 = vrot.slane %v141, 2
    %v143 = vmax.f32 %v141, %v142
    %v144 = vrot.slane %v143, 1
    %v145 = vmax.f32 %v143, %v144
    %v146 = vsub.f32 %v128, %v145
    %v147 = vsub.f32 %v133, %v145
    %v148 = vmul.f32 %v146, 1.442695
    %v149 = vpow.pop %v148
    %v150 = vmul.f32 %v147, 1.442695
    %v151 = vpow.pop %v150
    %v152 = vsel %vm136, %v149, 0.0
    %v153 = vsel %vm136, %v151, 0.0
    %v154 = vadd.f32 %v152, %v153
    %v155 = vrot.slane %v154, 4
    %v156 = vadd.f32 %v154, %v155
    %v157 = vrot.slane %v156, 2
    %v158 = vadd.f32 %v156, %v157
    %v159 = vrot.slane %v158, 1
    %v160 = vadd.f32 %v158, %v159
    %v161 = vrcp.pop %v160
    %v162 = vmul.f32 %v149, %v161
    %v163 = vmul.f32 %v151, %v161
    %164 = vst.msk [vmem:[#allocation7] sm:$0xff] %vm136, %v162
    %165 = vst.msk [vmem:[#allocation7 + $0x8] sm:$0xff] %vm136, %v163
    %v166 = vlaneseq
    %v167 = vshrl.u32 %v166, 7
    %v168 = vadd.s32 %v167, 8
    %v169 = vsel %vm136, %v162, -inf
    %v170 = vsel %vm136, %v163, -inf
    %v171 = vmax.f32 %v169, %v170
    %v172 = vrot.slane %v171, 4
    %v173 = vmax.f32 %v171, %v172
    %v174 = vrot.slane %v173, 2
    %v175 = vmax.f32 %v173, %v174
    %v176 = vrot.slane %v175, 1
    %v177 = vmax.f32 %v175, %v176
    %vm178 = vcmp.eq.f32.partialorder %v162, %v177
    %vm179 = vcmp.eq.f32.partialorder %v163, %v177
    %v180 = vsel %vm178, %v167, 16
    %v181 = vsel %vm179, %v168, 16
    %v182 = vsel %vm136, %v180, 2147483647
    %v183 = vsel %vm136, %v181, 2147483647
    %vm184 = vcmp.lt.s32.totalorder %v182, %v183
    %v185 = vsel %vm184, %v182, %v183
    %v186 = vrot.slane %v185, 4
    %vm187 = vcmp.lt.s32.totalorder %v185, %v186
    %v188 = vsel %vm187, %v185, %v186
    %v189 = vrot.slane %v188, 2
    %vm190 = vcmp.lt.s32.totalorder %v188, %v189
    %v191 = vsel %vm190, %v188, %v189
    %v192 = vrot.slane %v191, 1
    %vm193 = vcmp.lt.s32.totalorder %v191, %v192
    %v194 = vsel %vm193, %v191, %v192
    %vm195 = vcmask 122880
    %196 = vst.msk [vmem:[#allocation10] sm:$0x1] %vm195, %v194
    %vm197 = vcmp.eq.s32.totalorder %v167, %v194
    %vm198 = vcmp.eq.s32.totalorder %v168, %v194
    %v199 = vsel %vm197, -inf, %v162
    %v200 = vsel %vm198, -inf, %v163
    %v201 = vsel %vm136, %v199, -inf
    %v202 = vsel %vm136, %v200, -inf
    %v203 = vmax.f32 %v201, %v202
    %v204 = vrot.slane %v203, 4
    %v205 = vmax.f32 %v203, %v204
    %v206 = vrot.slane %v205, 2
    %v207 = vmax.f32 %v205, %v206
    %v208 = vrot.slane %v207, 1
    %v209 = vmax.f32 %v207, %v208
    %vm210 = vcmp.eq.f32.partialorder %v199, %v209
    %vm211 = vcmp.eq.f32.partialorder %v200, %v209
    %v212 = vsel %vm210, %v167, 16
    %v213 = vsel %vm211, %v168, 16
    %v214 = vsel %vm136, %v212, 2147483647
    %v215 = vsel %vm136, %v213, 2147483647
    %vm216 = vcmp.lt.s32.totalorder %v214, %v215
    %v217 = vsel %vm216, %v214, %v215
    %v218 = vrot.slane %v217, 4
    %vm219 = vcmp.lt.s32.totalorder %v217, %v218
    %v220 = vsel %vm219, %v217, %v218
    %v221 = vrot.slane %v220, 2
    %vm222 = vcmp.lt.s32.totalorder %v220, %v221
    %v223 = vsel %vm222, %v220, %v221
    %v224 = vrot.slane %v223, 1
    %vm225 = vcmp.lt.s32.totalorder %v223, %v224
    %v226 = vsel %vm225, %v223, %v224
    %227 = vst.msk [vmem:[#allocation10 + $0x1] sm:$0x1] %vm195, %v226
    %vm228 = vcmp.eq.s32.totalorder %v167, %v226
    %vm229 = vcmp.eq.s32.totalorder %v168, %v226
    %v230 = vsel %vm228, -inf, %v199
    %v231 = vsel %vm229, -inf, %v200
    %v232 = vsel %vm136, %v230, -inf
    %v233 = vsel %vm136, %v231, -inf
    %v234 = vmax.f32 %v232, %v233
    %v235 = vrot.slane %v234, 4
    %v236 = vmax.f32 %v234, %v235
    %v237 = vrot.slane %v236, 2
    %v238 = vmax.f32 %v236, %v237
    %v239 = vrot.slane %v238, 1
    %v240 = vmax.f32 %v238, %v239
    %vm241 = vcmp.eq.f32.partialorder %v230, %v240
    %vm242 = vcmp.eq.f32.partialorder %v231, %v240
    %v243 = vsel %vm241, %v167, 16
    %v244 = vsel %vm242, %v168, 16
    %v245 = vsel %vm136, %v243, 2147483647
    %v246 = vsel %vm136, %v244, 2147483647
    %vm247 = vcmp.lt.s32.totalorder %v245, %v246
    %v248 = vsel %vm247, %v245, %v246
    %v249 = vrot.slane %v248, 4
    %vm250 = vcmp.lt.s32.totalorder %v248, %v249
    %v251 = vsel %vm250, %v248, %v249
    %v252 = vrot.slane %v251, 2
    %vm253 = vcmp.lt.s32.totalorder %v251, %v252
    %v254 = vsel %vm253, %v251, %v252
    %v255 = vrot.slane %v254, 1
    %vm256 = vcmp.lt.s32.totalorder %v254, %v255
    %v257 = vsel %vm256, %v254, %v255
    %258 = vst.msk [vmem:[#allocation10 + $0x2] sm:$0x1] %vm195, %v257
    %vm259 = vcmp.eq.s32.totalorder %v167, %v257
    %vm260 = vcmp.eq.s32.totalorder %v168, %v257
    %v261 = vsel %vm259, -inf, %v230
    %v262 = vsel %vm260, -inf, %v231
    %v263 = vsel %vm136, %v261, -inf
    %v264 = vsel %vm136, %v262, -inf
    %v265 = vmax.f32 %v263, %v264
    %v266 = vrot.slane %v265, 4
    %v267 = vmax.f32 %v265, %v266
    %v268 = vrot.slane %v267, 2
    %v269 = vmax.f32 %v267, %v268
    %v270 = vrot.slane %v269, 1
    %v271 = vmax.f32 %v269, %v270
    %vm272 = vcmp.eq.f32.partialorder %v261, %v271
    %vm273 = vcmp.eq.f32.partialorder %v262, %v271
    %v274 = vsel %vm272, %v167, 16
    %v275 = vsel %vm273, %v168, 16
    %v276 = vsel %vm136, %v274, 2147483647
    %v277 = vsel %vm136, %v275, 2147483647
    %vm278 = vcmp.lt.s32.totalorder %v276, %v277
    %v279 = vsel %vm278, %v276, %v277
    %v280 = vrot.slane %v279, 4
    %vm281 = vcmp.lt.s32.totalorder %v279, %v280
    %v282 = vsel %vm281, %v279, %v280
    %v283 = vrot.slane %v282, 2
    %vm284 = vcmp.lt.s32.totalorder %v282, %v283
    %v285 = vsel %vm284, %v282, %v283
    %v286 = vrot.slane %v285, 1
    %vm287 = vcmp.lt.s32.totalorder %v285, %v286
    %v288 = vsel %vm287, %v285, %v286
    %289 = vst.msk [vmem:[#allocation10 + $0x3] sm:$0x1] %vm195, %v288
    %v290 = vadd.f32 %v177, 0.0
    %v291 = vadd.f32 %v290, %v209
    %v292 = vadd.f32 %v291, %v240
    %v293 = vadd.f32 %v292, %v271
    %v294 = vrcp.pop %v293
    %v295 = vmul.f32 %v177, %v294
    %296 = vst.msk [vmem:[#allocation8] sm:$0x1] %vm195, %v295
    %v297 = vmul.f32 %v209, %v294
    %298 = vst.msk [vmem:[#allocation8 + $0x1] sm:$0x1] %vm195, %v297
    %v299 = vmul.f32 %v240, %v294
    %300 = vst.msk [vmem:[#allocation8 + $0x2] sm:$0x1] %vm195, %v299
    %v301 = vmul.f32 %v271, %v294
    %302 = vst.msk [vmem:[#allocation8 + $0x3] sm:$0x1] %vm195, %v301
    // Predicated region
    $region18: #{tpu_custom_call.1} parent=1 // pred_check
      _
    $region19: #{tpu_custom_call.1} parent=1 // pred_check_branch
      %304 = sbr.rel (0) target = $region21
    $region20: #{tpu_custom_call.1} parent=1 // pred_region
      %s306 = ssub.s32 256, 256
      %307 = vsyncadd [#allocation4], %s306
      %s308 = sshll.u32 [#allocation7], 4
      %s309 = int_to_ptr.vmem [resolvable:$true] %s308
      %314 = dma.vmem_to_hbm [thread:$0]  %s309, 256, %s2, [#allocation4], 128, 128, 8
    $region21: #{tpu_custom_call.1} parent=1 // pred_fallthru
      _
    // Predicated region
    $region22: #{tpu_custom_call.1} parent=1 // pred_check
      _
    $region23: #{tpu_custom_call.1} parent=1 // pred_check_branch
      %316 = sbr.rel (0) target = $region25
    $region24: #{tpu_custom_call.1} parent=1 // pred_region
      %s318 = ssub.s32 64, 64
      %319 = vsyncadd [#allocation9], %s318
      %s321 = sshll.u32 [#allocation8], 4
      %s322 = int_to_ptr.vmem [resolvable:$true] %s321
      %324 = dma.vmem_to_hbm [thread:$0]  %s322, 64, %s3, [#allocation9]
    $region25: #{tpu_custom_call.1} parent=1 // pred_fallthru
      _
    // Predicated region
    $region26: #{tpu_custom_call.1} parent=1 // pred_check
      _
    $region27: #{tpu_custom_call.1} parent=1 // pred_check_branch
      %326 = sbr.rel (0) target = $region29
    $region28: #{tpu_custom_call.1} parent=1 // pred_region
      %s328 = ssub.s32 64, 64
      %329 = vsyncadd [#allocation9], %s328
      %s331 = sshll.u32 [#allocation10], 4
      %s332 = int_to_ptr.vmem [resolvable:$true] %s331
      %334 = dma.vmem_to_hbm [thread:$0]  %s332, 64, %s4, [#allocation9]
    $region29: #{tpu_custom_call.1} parent=1 // pred_fallthru
      _
    // Predicated region
    $region30: #{tpu_custom_call.1} parent=1 // pred_check
      _
    $region31: #{tpu_custom_call.1} parent=1 // pred_check_branch
      %336 = sbr.rel (0) target = $region33
    $region32: #{tpu_custom_call.1} parent=1 // pred_region
      %337 = dma.done [#allocation4], 256
    $region33: #{tpu_custom_call.1} parent=1 // pred_fallthru
      _
    // Predicated region
    $region34: #{tpu_custom_call.1} parent=1 // pred_check
      _
    $region35: #{tpu_custom_call.1} parent=1 // pred_check_branch
      %339 = sbr.rel (0) target = $region37
    $region36: #{tpu_custom_call.1} parent=1 // pred_region
      %340 = dma.done [#allocation9], 64
    $region37: #{tpu_custom_call.1} parent=1 // pred_fallthru
      _
    // Predicated region
    $region38: #{tpu_custom_call.1} parent=1 // pred_check
      _
    $region39: #{tpu_custom_call.1} parent=1 // pred_check_branch
      %342 = sbr.rel (0) target = $region41
    $region40: #{tpu_custom_call.1} parent=1 // pred_region
      %343 = dma.done [#allocation9], 64
    $region41: #{tpu_custom_call.1} parent=1 // pred_fallthru
      _
    %344 = vsyncpa [#allocation3], 1
    %345 = vsyncpa [#allocation6], 1
    %346 = vsyncpa [#allocation4], 1
    %347 = vsyncpa [#allocation9], 1

</llo_original>
